<compile_context>
chip_gen: v5e
topology: v5e:2x2
jax: 0.10.0
libtpu: 0.0.40
codegen_flags: <defaults>
</compile_context>

<pallas_src>
import jax
import jax.numpy as jnp
from jax.experimental import pallas as pl
from jax.experimental.pallas import tpu as pltpu

LANE = 128      # f32 lane width
SUBLANE = 8     # f32 sublane width


def _round_up(x, m):
    return (x + m - 1) // m * m


def vae_decoder_kernel(x_ref, w1_ref, b1_ref, w2_ref, b2_ref, w3_ref, b3_ref, o_ref):
    # ---- Layer 1 on the VPU (K = num_hidden is tiny; skip the MXU entirely) ----
    x = x_ref[...]                      # (TB, H) f32
    w1 = w1_ref[...]                    # (H, 64) f32
    num_hidden = x.shape[1]
    acc = jnp.broadcast_to(b1_ref[...], (x.shape[0], w1.shape[1]))   # (TB, 64)
    for k in range(num_hidden):         # unrolled at trace time (H static & small)
        acc = acc + x[:, k:k + 1] * w1[k:k + 1, :]
    h1 = jnp.maximum(acc, 0.0)

    # ---- Layer 2 (MXU, bf16 inputs / f32 accumulate): (TB, 64) @ (64, 256) ----
    h2 = jnp.dot(h1.astype(jnp.bfloat16), w2_ref[...],
                 preferred_element_type=jnp.float32) + b2_ref[...]
    h2 = jnp.maximum(h2, 0.0)

    # ---- Layer 3 (MXU, bf16/f32): (TB, 256) @ (256, out_pad), out_pad lane-dense ----
    o_ref[...] = (
        jnp.dot(h2.astype(jnp.bfloat16), w3_ref[...],
                preferred_element_type=jnp.float32) + b3_ref[...]
    ).astype(o_ref.dtype)


def _resident_spec(shape):
    """Full-array block, constant index_map (weights/biases stay resident).
    Single-buffered: the same block is reused every grid step."""
    try:
        return pl.BlockSpec(shape, lambda i: (0, 0), pipeline_mode=pl.Buffered(1))
    except TypeError:  # older jax without pipeline_mode kwarg
        return pl.BlockSpec(shape, lambda i: (0, 0))


def vae_decoder(x, params, *, batch_tile=2048):
    """x: (B, num_hidden) float32; params: dict of (in, out) weights and (1, out) biases."""
    w1, b1 = params["w1"], params["b1"]
    w2, b2 = params["w2"], params["b2"]
    w3, b3 = params["w3"], params["b3"]

    B, H = x.shape
    out_dim = w3.shape[1]

    # Lane-dense output: pad the last layer's output columns to a multiple of 128.
    out_pad = _round_up(out_dim, LANE)
    if out_pad != out_dim:
        w3 = jnp.pad(w3, ((0, 0), (0, out_pad - out_dim)))
        b3 = jnp.pad(b3, ((0, 0), (0, out_pad - out_dim)))

    # MXU operands in bf16 (f32 accumulation happens in-kernel).
    w2 = w2.astype(jnp.bfloat16)
    w3 = w3.astype(jnp.bfloat16)

    # ---- Batch tiling ----
    # tb is a multiple of 8 (f32 sublane), capped at `batch_tile`, and also capped
    # so the grid has >= 2 steps whenever the batch allows (v7x megacore split).
    b8 = _round_up(B, SUBLANE)
    tb_cap = _round_up(min(batch_tile, b8), SUBLANE)
    min_steps = 2 if b8 >= 2 * SUBLANE else 1
    steps = max(pl.cdiv(b8, tb_cap), min_steps)
    tb = _round_up(pl.cdiv(b8, steps), SUBLANE)
    b_pad = _round_up(B, tb)
    if b_pad != B:
        x = jnp.pad(x, ((0, b_pad - B), (0, 0)))
    grid = (b_pad // tb,)

    flops = 2 * b_pad * (H * 64 + 64 * 256 + 256 * out_pad)
    bytes_accessed = (
        4 * (b_pad * H + b_pad * out_pad + w1.size + b1.size + b2.size + b3.size)
        + 2 * (w2.size + w3.size)
    )
    cost = pl.CostEstimate(flops=flops, transcendentals=0,
                           bytes_accessed=bytes_accessed)

    out = pl.pallas_call(
        vae_decoder_kernel,
        out_shape=jax.ShapeDtypeStruct((b_pad, out_pad), jnp.float32),
        grid=grid,
        in_specs=[
            pl.BlockSpec((tb, H), lambda i: (i, 0)),   # x: tiled over batch
            _resident_spec(w1.shape),
            _resident_spec(b1.shape),
            _resident_spec(w2.shape),
            _resident_spec(b2.shape),
            _resident_spec(w3.shape),
            _resident_spec(b3.shape),
        ],
        out_specs=pl.BlockSpec((tb, out_pad), lambda i: (i, 0)),
        compiler_params=pltpu.CompilerParams(
            dimension_semantics=("parallel",),         # megacore-shard batch on v7x
            vmem_limit_bytes=32 << 20,                 # big tiles legal on v5e too
        ),
        cost_estimate=cost,
    )(x, w1, b1, w2, b2, w3, b3)

    # Strip batch padding and the lane-padding of the output columns.
    return out[:B, :out_dim]


def init_params(key, num_hidden, output_dim):
    """Deterministic parameter init mimicking nn.Linear shapes ((in, out) layout)."""
    ks = jax.random.split(key, 6)

    def linear_init(kw, kb, fan_in, fan_out):
        bound = 1.0 / jnp.sqrt(fan_in)
        w = jax.random.uniform(kw, (fan_in, fan_out), jnp.float32, -bound, bound)
        b = jax.random.uniform(kb, (1, fan_out), jnp.float32, -bound, bound)
        return w, b

    w1, b1 = linear_init(ks[0], ks[1], num_hidden, 64)
    w2, b2 = linear_init(ks[2], ks[3], 64, 256)
    w3, b3 = linear_init(ks[4], ks[5], 256, output_dim)
    return {"w1": w1, "b1": b1, "w2": w2, "b2": b2, "w3": w3, "b3": b3}


def vae_decoder_ref(x, params):
    h1 = jnp.maximum(x @ params["w1"] + params["b1"], 0.0)
    h2 = jnp.maximum(h1 @ params["w2"] + params["b2"], 0.0)
    return h2 @ params["w3"] + params["b3"]


if __name__ == "__main__":
    key = jax.random.PRNGKey(0)

    # --- Case 1: small batch, grid=(1,) ---
    k_x, k_p = jax.random.split(key)
    B, num_hidden, output_dim = 8, 2, 32
    x = jax.random.normal(k_x, (B, num_hidden), dtype=jnp.float32)
    params = init_params(k_p, num_hidden, output_dim)

    out = jax.block_until_ready(vae_decoder(x, params))
    ref = vae_decoder_ref(x, params)
    assert out.shape == (B, output_dim)
    # bf16 MXU inputs with f32 accumulation -> relaxed tolerance vs f32 reference.
    assert jnp.allclose(out, ref, atol=2e-2, rtol=2e-2), "mismatch vs reference (small)"

    # --- Case 2: multi-step grid + batch padding + out_dim not a multiple of 128 ---
    k_x2, k_p2 = jax.random.split(jax.random.PRNGKey(1))
    B2, out_dim2 = 1037, 48
    x2 = jax.random.normal(k_x2, (B2, num_hidden), dtype=jnp.float32)
    params2 = init_params(k_p2, num_hidden, out_dim2)

    out2 = jax.block_until_ready(vae_decoder(x2, params2, batch_tile=2048))
    ref2 = vae_decoder_ref(x2, params2)
    assert out2.shape == (B2, out_dim2)
    assert jnp.allclose(out2, ref2, atol=2e-2, rtol=2e-2), "mismatch vs reference (large)"

    print("KERNEL_OK")
</pallas_src>

<mosaic_0001>
module attributes {stable_mosaic.version = 11 : i64} {
  func.func @vae_decoder_kernel(%arg0: i32, %arg1: memref<8x2xf32, #tpu.memory_space<vmem>>, %arg2: memref<2x64xf32, #tpu.memory_space<vmem>>, %arg3: memref<1x64xf32, #tpu.memory_space<vmem>>, %arg4: memref<64x256xbf16, #tpu.memory_space<vmem>>, %arg5: memref<1x256xf32, #tpu.memory_space<vmem>>, %arg6: memref<256x128xbf16, #tpu.memory_space<vmem>>, %arg7: memref<1x128xf32, #tpu.memory_space<vmem>>, %arg8: memref<8x128xf32, #tpu.memory_space<vmem>>) attributes {dimension_semantics = [#tpu.dimension_semantics<parallel>], iteration_bounds = array<i64: 1>, scalar_prefetch = 0 : i64, scratch_operands = 0 : i64, tpu.core_type = #tpu.core_type<tc>, window_params = [{transform_indices = @transform_0, window_bounds = array<i64: 8, 2>}, {pipeline_mode = #tpu.pipeline_mode<synchronous>, transform_indices = @transform_1, window_bounds = array<i64: 2, 64>}, {pipeline_mode = #tpu.pipeline_mode<synchronous>, transform_indices = @transform_2, window_bounds = array<i64: 1, 64>}, {pipeline_mode = #tpu.pipeline_mode<synchronous>, transform_indices = @transform_3, window_bounds = array<i64: 64, 256>}, {pipeline_mode = #tpu.pipeline_mode<synchronous>, transform_indices = @transform_4, window_bounds = array<i64: 1, 256>}, {pipeline_mode = #tpu.pipeline_mode<synchronous>, transform_indices = @transform_5, window_bounds = array<i64: 256, 128>}, {pipeline_mode = #tpu.pipeline_mode<synchronous>, transform_indices = @transform_6, window_bounds = array<i64: 1, 128>}, {transform_indices = @transform_7, window_bounds = array<i64: 8, 128>}]} {
    %c0 = arith.constant 0 : index
    %c0_0 = arith.constant 0 : index
    %0 = vector.load %arg1[%c0, %c0_0] : memref<8x2xf32, #tpu.memory_space<vmem>>, vector<8x2xf32>
    %c0_1 = arith.constant 0 : index
    %c0_2 = arith.constant 0 : index
    %1 = vector.load %arg2[%c0_1, %c0_2] : memref<2x64xf32, #tpu.memory_space<vmem>>, vector<2x64xf32>
    %c0_3 = arith.constant 0 : index
    %c0_4 = arith.constant 0 : index
    %2 = vector.load %arg3[%c0_3, %c0_4] : memref<1x64xf32, #tpu.memory_space<vmem>>, vector<1x64xf32>
    %3 = vector.shape_cast %2 : vector<1x64xf32> to vector<1x64xf32>
    %4 = vector.broadcast %3 : vector<1x64xf32> to vector<8x64xf32>
    %5 = vector.extract_strided_slice %0 {offsets = [0, 0], sizes = [8, 1], strides = [1, 1]} : vector<8x2xf32> to vector<8x1xf32>
    %6 = vector.extract_strided_slice %1 {offsets = [0, 0], sizes = [1, 64], strides = [1, 1]} : vector<2x64xf32> to vector<1x64xf32>
    %7 = vector.broadcast %5 : vector<8x1xf32> to vector<8x64xf32>
    %8 = vector.broadcast %6 : vector<1x64xf32> to vector<8x64xf32>
    %9 = arith.mulf %7, %8 : vector<8x64xf32>
    %10 = arith.addf %4, %9 : vector<8x64xf32>
    %11 = vector.extract_strided_slice %0 {offsets = [0, 1], sizes = [8, 1], strides = [1, 1]} : vector<8x2xf32> to vector<8x1xf32>
    %12 = vector.extract_strided_slice %1 {offsets = [1, 0], sizes = [1, 64], strides = [1, 1]} : vector<2x64xf32> to vector<1x64xf32>
    %13 = vector.broadcast %11 : vector<8x1xf32> to vector<8x64xf32>
    %14 = vector.broadcast %12 : vector<1x64xf32> to vector<8x64xf32>
    %15 = arith.mulf %13, %14 : vector<8x64xf32>
    %16 = arith.addf %10, %15 : vector<8x64xf32>
    %cst = arith.constant 0.000000e+00 : f32
    %17 = vector.broadcast %cst : f32 to vector<8x64xf32>
    %18 = arith.maximumf %16, %17 : vector<8x64xf32>
    %19 = arith.truncf %18 : vector<8x64xf32> to vector<8x64xbf16>
    %c0_5 = arith.constant 0 : index
    %c0_6 = arith.constant 0 : index
    %20 = vector.load %arg4[%c0_5, %c0_6] : memref<64x256xbf16, #tpu.memory_space<vmem>>, vector<64x256xbf16>
    %cst_7 = arith.constant dense<0.000000e+00> : vector<8x256xf32>
    %21 = tpu.matmul %19, %20, %cst_7 {dimension_numbers = #tpu.dot_dimension_numbers<[1], [0], [0], [1], [0, 0, 1, 1], [], []>} : vector<8x64xbf16>, vector<64x256xbf16>, vector<8x256xf32> -> vector<8x256xf32>
    %c0_8 = arith.constant 0 : index
    %c0_9 = arith.constant 0 : index
    %22 = vector.load %arg5[%c0_8, %c0_9] : memref<1x256xf32, #tpu.memory_space<vmem>>, vector<1x256xf32>
    %23 = vector.broadcast %22 : vector<1x256xf32> to vector<8x256xf32>
    %24 = arith.addf %21, %23 : vector<8x256xf32>
    %cst_10 = arith.constant 0.000000e+00 : f32
    %25 = vector.broadcast %cst_10 : f32 to vector<8x256xf32>
    %26 = arith.maximumf %24, %25 : vector<8x256xf32>
    %27 = arith.truncf %26 : vector<8x256xf32> to vector<8x256xbf16>
    %c0_11 = arith.constant 0 : index
    %c0_12 = arith.constant 0 : index
    %28 = vector.load %arg6[%c0_11, %c0_12] : memref<256x128xbf16, #tpu.memory_space<vmem>>, vector<256x128xbf16>
    %cst_13 = arith.constant dense<0.000000e+00> : vector<8x128xf32>
    %29 = tpu.matmul %27, %28, %cst_13 {dimension_numbers = #tpu.dot_dimension_numbers<[1], [0], [0], [1], [0, 0, 1, 1], [], []>} : vector<8x256xbf16>, vector<256x128xbf16>, vector<8x128xf32> -> vector<8x128xf32>
    %c0_14 = arith.constant 0 : index
    %c0_15 = arith.constant 0 : index
    %30 = vector.load %arg7[%c0_14, %c0_15] : memref<1x128xf32, #tpu.memory_space<vmem>>, vector<1x128xf32>
    %31 = vector.broadcast %30 : vector<1x128xf32> to vector<8x128xf32>
    %32 = arith.addf %29, %31 : vector<8x128xf32>
    %c0_16 = arith.constant 0 : index
    %c0_17 = arith.constant 0 : index
    %33 = vector.load %arg8[%c0_16, %c0_17] : memref<8x128xf32, #tpu.memory_space<vmem>>, vector<8x128xf32>
    tpu.vector_store %arg8[%c0_16, %c0_17], %32 {strides = array<i32>} : memref<8x128xf32, #tpu.memory_space<vmem>>, vector<8x128xf32>,
    return
  }
  func.func @transform_0(%arg0: i32) -> (i32, i32) {
    %c0_i32 = arith.constant 0 : i32
    %c0_i32_0 = arith.constant 0 : i32
    return %arg0, %c0_i32 : i32, i32
  }
  func.func @transform_1(%arg0: i32) -> (i32, i32) {
    %c0_i32 = arith.constant 0 : i32
    %c0_i32_0 = arith.constant 0 : i32
    %c0_i32_1 = arith.constant 0 : i32
    return %c0_i32, %c0_i32_0 : i32, i32
  }
  func.func @transform_2(%arg0: i32) -> (i32, i32) {
    %c0_i32 = arith.constant 0 : i32
    %c0_i32_0 = arith.constant 0 : i32
    %c0_i32_1 = arith.constant 0 : i32
    return %c0_i32, %c0_i32_0 : i32, i32
  }
  func.func @transform_3(%arg0: i32) -> (i32, i32) {
    %c0_i32 = arith.constant 0 : i32
    %c0_i32_0 = arith.constant 0 : i32
    %c0_i32_1 = arith.constant 0 : i32
    return %c0_i32, %c0_i32_0 : i32, i32
  }
  func.func @transform_4(%arg0: i32) -> (i32, i32) {
    %c0_i32 = arith.constant 0 : i32
    %c0_i32_0 = arith.constant 0 : i32
    %c0_i32_1 = arith.constant 0 : i32
    return %c0_i32, %c0_i32_0 : i32, i32
  }
  func.func @transform_5(%arg0: i32) -> (i32, i32) {
    %c0_i32 = arith.constant 0 : i32
    %c0_i32_0 = arith.constant 0 : i32
    %c0_i32_1 = arith.constant 0 : i32
    return %c0_i32, %c0_i32_0 : i32, i32
  }
  func.func @transform_6(%arg0: i32) -> (i32, i32) {
    %c0_i32 = arith.constant 0 : i32
    %c0_i32_0 = arith.constant 0 : i32
    %c0_i32_1 = arith.constant 0 : i32
    return %c0_i32, %c0_i32_0 : i32, i32
  }
  func.func @transform_7(%arg0: i32) -> (i32, i32) {
    %c0_i32 = arith.constant 0 : i32
    %c0_i32_0 = arith.constant 0 : i32
    return %arg0, %c0_i32 : i32, i32
  }
}

</mosaic_0001>

<llo_original>
// kernel: tpu_custom_call.1
$region0: #{tpu_custom_call.1}
  #allocation0 [shape = 'u32[]', space=smem, size = 0x4, offset = 0x4, fixed_abs, tag = 'smem constant byte address 0x4 - core index']
  #allocation1 [shape = 'u32[72,128]{1,0:T(1,128)}', space=vmem, size = 0x9000, scoped, tag = 'internal scratch']
  %s0 = inlined_call_operand.vmem [shape: f32[8,2], index: 0, kind: input, shape index: {}]
  %s1 = inlined_call_operand.vmem [shape: f32[2,64], index: 1, kind: input, shape index: {}]
  %s2 = inlined_call_operand.vmem [shape: f32[1,64], index: 2, kind: input, shape index: {}]
  %s3 = inlined_call_operand.hbm [shape: bf16[64,256], index: 3, kind: input, shape index: {}]
  %s4 = inlined_call_operand.vmem [shape: f32[1,256], index: 4, kind: input, shape index: {}]
  %s5 = inlined_call_operand.hbm [shape: bf16[256,128], index: 5, kind: input, shape index: {}]
  %s6 = inlined_call_operand.vmem [shape: f32[1,128], index: 6, kind: input, shape index: {}]
  %s7 = inlined_call_operand.hbm [shape: f32[8,128], index: 7, kind: output, shape index: {}]
  %s8 = sld [smem:[#allocation0]]
  $region46: #{tpu_custom_call.1} parent=0
    _
  %s10 = ssub.s32 1, %s8
  %s11 = scalar_select 0, %s10, %s8
  $region1: #{tpu_custom_call.1} parent=0
    #allocation2 [shape = 'u8[32768]{0}', space=vmem, size = 0x8000, scoped, tag = 'input window, operand 3, single buffered']
    #allocation3 [shape = 's32[1]{0}', space=sflag, size = 0x4, scoped, tag = 'scoped memory for tpu_custom_call.1']
    #allocation4 [shape = 's32[1]{0}', space=sflag, size = 0x4, scoped, tag = 'scoped memory for tpu_custom_call.1']
    #allocation5 [shape = 'u8[65536]{0}', space=vmem, size = 0x10000, scoped, tag = 'input window, operand 5, single buffered']
    #allocation6 [shape = 's32[1]{0}', space=sflag, size = 0x4, scoped, tag = 'scoped memory for tpu_custom_call.1']
    #allocation7 [shape = 'u8[4096]{0}', space=vmem, size = 0x1000, scoped, tag = 'output window, operand 0, single buffered']
    %12 = vsyncpa [#allocation3], 0
    %13 = vsyncpa [#allocation6], 0
    %14 = vsyncpa [#allocation4], 0
    // Predicated region
    $region2: #{tpu_custom_call.1} parent=1 // pred_check
      _
    $region3: #{tpu_custom_call.1} parent=1 // pred_check_branch
      %16 = sbr.rel (0) target = $region5
    $region4: #{tpu_custom_call.1} parent=1 // pred_region
      _
    $region5: #{tpu_custom_call.1} parent=1 // pred_fallthru
      _
    // Predicated region
    $region6: #{tpu_custom_call.1} parent=1 // pred_check
      _
    $region7: #{tpu_custom_call.1} parent=1 // pred_check_branch
      %18 = sbr.rel (0) target = $region9
    $region8: #{tpu_custom_call.1} parent=1 // pred_region
      _
    $region9: #{tpu_custom_call.1} parent=1 // pred_fallthru
      _
    // Predicated region
    $region10: #{tpu_custom_call.1} parent=1 // pred_check
      _
    $region11: #{tpu_custom_call.1} parent=1 // pred_check_branch
      %20 = sbr.rel (0) target = $region13
    $region12: #{tpu_custom_call.1} parent=1 // pred_region
      _
    $region13: #{tpu_custom_call.1} parent=1 // pred_fallthru
      _
    // Predicated region
    $region14: #{tpu_custom_call.1} parent=1 // pred_check
      _
    $region15: #{tpu_custom_call.1} parent=1 // pred_check_branch
      %22 = sbr.rel (0) target = $region17
    $region16: #{tpu_custom_call.1} parent=1 // pred_region
      %24 = vsyncadd [#allocation3], 0
      %s25 = sshll.u32 %s3, 4
      %s26 = int_to_ptr.hbm [resolvable:$true] %s25
      %s27 = sshll.u32 [#allocation2], 4
      %s28 = int_to_ptr.vmem [resolvable:$true] %s27
      %33 = dma.hbm_to_vmem [thread:$0]  %s26, 1024, %s28, [#allocation3], 128, 128, 8
    $region17: #{tpu_custom_call.1} parent=1 // pred_fallthru
      _
    // Predicated region
    $region18: #{tpu_custom_call.1} parent=1 // pred_check
      _
    $region19: #{tpu_custom_call.1} parent=1 // pred_check_branch
      %35 = sbr.rel (0) target = $region21
    $region20: #{tpu_custom_call.1} parent=1 // pred_region
      _
    $region21: #{tpu_custom_call.1} parent=1 // pred_fallthru
      _
    // Predicated region
    $region22: #{tpu_custom_call.1} parent=1 // pred_check
      _
    $region23: #{tpu_custom_call.1} parent=1 // pred_check_branch
      %37 = sbr.rel (0) target = $region25
    $region24: #{tpu_custom_call.1} parent=1 // pred_region
      %39 = vsyncadd [#allocation6], 0
      %s40 = sshll.u32 %s5, 4
      %s41 = int_to_ptr.hbm [resolvable:$true] %s40
      %s42 = sshll.u32 [#allocation5], 4
      %s43 = int_to_ptr.vmem [resolvable:$true] %s42
      %48 = dma.hbm_to_vmem [thread:$0]  %s41, 2048, %s43, [#allocation6], 64, 64, 4
    $region25: #{tpu_custom_call.1} parent=1 // pred_fallthru
      _
    // Predicated region
    $region26: #{tpu_custom_call.1} parent=1 // pred_check
      _
    $region27: #{tpu_custom_call.1} parent=1 // pred_check_branch
      %50 = sbr.rel (0) target = $region29
    $region28: #{tpu_custom_call.1} parent=1 // pred_region
      _
    $region29: #{tpu_custom_call.1} parent=1 // pred_fallthru
      _
    // Predicated region
    $region30: #{tpu_custom_call.1} parent=1 // pred_check
      _
    $region31: #{tpu_custom_call.1} parent=1 // pred_check_branch
      %52 = sbr.rel (0) target = $region33
    $region32: #{tpu_custom_call.1} parent=1 // pred_region
      %54 = dma.done [#allocation3], 1024
    $region33: #{tpu_custom_call.1} parent=1 // pred_fallthru
      _
    // Predicated region
    $region34: #{tpu_custom_call.1} parent=1 // pred_check
      _
    $region35: #{tpu_custom_call.1} parent=1 // pred_check_branch
      %56 = sbr.rel (0) target = $region37
    $region36: #{tpu_custom_call.1} parent=1 // pred_region
      %58 = dma.done [#allocation6], 2048
    $region37: #{tpu_custom_call.1} parent=1 // pred_fallthru
      _
    %v60 = vld [vmem:[%s0] sm:$0xff]
    %v61 = vld [vmem:[%s1] sm:$0x3]
    %v62 = vld [vmem:[%s2] sm:$0x1]
    %v64 = vperm.slane %v62, 0
    %67 = vset.pattern.permute.xlu0 0
    %68 = vperm.xlu0 %67, %v60
    %v69 = vpop.permute.xlu0 %68
    %v71 = vperm.slane %v61, 0
    %v72 = vmul.f32 %v69, %v71
    %v73 = vadd.f32 %v64, %v72
    %74 = vset.pattern.permute.xlu0 1
    %75 = vperm.xlu0 %74, %v60
    %v76 = vpop.permute.xlu0 %75
    %v78 = vperm.slane %v61, 1
    %v79 = vmul.f32 %v76, %v78
    %v80 = vadd.f32 %v73, %v79
    %v81 = vmax.f32 %v80, 0.0
    %v82 = vpack.c.bf16 %v81, %v81
    %v83 = vld [vmem:[#allocation2] sm:$0xff]
    %v84 = vld [vmem:[#allocation2 + $0x8] sm:$0xff]
    %v85 = vld [vmem:[#allocation2 + $0x10] sm:$0xff]
    %v86 = vld [vmem:[#allocation2 + $0x18] sm:$0xff]
    %v87 = vld [vmem:[#allocation2 + $0x20] sm:$0xff]
    %v88 = vld [vmem:[#allocation2 + $0x28] sm:$0xff]
    %v89 = vld [vmem:[#allocation2 + $0x30] sm:$0xff]
    %v90 = vld [vmem:[#allocation2 + $0x38] sm:$0xff]
    %v91 = vld [vmem:[%s4] sm:$0x3]
    %v93 = vperm.slane %v91, 0
    %v94 = vperm.slane %v91, 1
    %v105 = vunpack.c.l.b16 %v83
    %v106 = vunpack.c.h.b16 %v83
    %v107 = vunpack.c.l.b16 %v84
    %v108 = vunpack.c.h.b16 %v84
    %v109 = vunpack.c.l.b16 %v85
    %v110 = vunpack.c.h.b16 %v85
    %v111 = vunpack.c.l.b16 %v86
    %v112 = vunpack.c.h.b16 %v86
    %v113 = vunpack.c.l.b16 %v87
    %v114 = vunpack.c.h.b16 %v87
    %v115 = vunpack.c.l.b16 %v88
    %v116 = vunpack.c.h.b16 %v88
    %v117 = vunpack.c.l.b16 %v89
    %v118 = vunpack.c.h.b16 %v89
    %v119 = vunpack.c.l.b16 %v90
    %v120 = vunpack.c.h.b16 %v90
    %v121 = vpack.c.b16 %v107, %v105
    %v122 = vpack.c.b16 %v108, %v106
    %v123 = vpack.c.b16 %v111, %v109
    %v124 = vpack.c.b16 %v112, %v110
    %v125 = vpack.c.b16 %v115, %v113
    %v126 = vpack.c.b16 %v116, %v114
    %v127 = vpack.c.b16 %v119, %v117
    %v128 = vpack.c.b16 %v120, %v118
    %vm137 = vcmask 523264
    %v139 = vsel %vm137, %v82, 0
    %141 = vmatpush.bf16.msra.mxu0 0
    %142 = vmatpush.bf16.msra.mxu0 0
    %143 = vmatpush.bf16.msra.mxu0 0
    %144 = vmatpush.bf16.msra.mxu0 0
    %145 = vmatpush.bf16.msra.mxu0 %v127
    %146 = vmatpush.bf16.msra.mxu0 %v125
    %147 = vmatpush.bf16.msra.mxu0 %v123
    %148 = vmatpush.bf16.msra.mxu0 %v121
    %149 = vmatmul.bf16.gmra.mxu0 %v139
    %v150 = vpop.f32.mrf.mxu0
    %v151 = vadd.f32 %v93, %v150
    %v152 = vpop.f32.mrf.mxu0
    %153 = vdwg.mxu0
    %154 = vmatpush.bf16.msra.mxu0 0
    %155 = vmatpush.bf16.msra.mxu0 0
    %156 = vmatpush.bf16.msra.mxu0 0
    %157 = vmatpush.bf16.msra.mxu0 0
    %158 = vmatpush.bf16.msra.mxu0 %v128
    %159 = vmatpush.bf16.msra.mxu0 %v126
    %160 = vmatpush.bf16.msra.mxu0 %v124
    %161 = vmatpush.bf16.msra.mxu0 %v122
    %162 = vmatmul.bf16.gmra.mxu0 %v139
    %v163 = vpop.f32.mrf.mxu0
    %v164 = vadd.f32 %v94, %v163
    %v165 = vpop.f32.mrf.mxu0
    %166 = vdwg.mxu0
    %v167 = vmax.f32 %v151, 0.0
    %v168 = vmax.f32 %v164, 0.0
    %v169 = vpack.c.bf16 %v167, %v167
    %v170 = vpack.c.bf16 %v168, %v168
    %v171 = vld [vmem:[#allocation5] sm:$0xf]
    %v172 = vld [vmem:[#allocation5 + $0x4] sm:$0xf]
    %v173 = vld [vmem:[#allocation5 + $0x8] sm:$0xf]
    %v174 = vld [vmem:[#allocation5 + $0xc] sm:$0xf]
    %v175 = vld [vmem:[#allocation5 + $0x10] sm:$0xf]
    %v176 = vld [vmem:[#allocation5 + $0x14] sm:$0xf]
    %v177 = vld [vmem:[#allocation5 + $0x18] sm:$0xf]
    %v178 = vld [vmem:[#allocation5 + $0x1c] sm:$0xf]
    %v179 = vld [vmem:[#allocation5 + $0x20] sm:$0xf]
    %v180 = vld [vmem:[#allocation5 + $0x24] sm:$0xf]
    %v181 = vld [vmem:[#allocation5 + $0x28] sm:$0xf]
    %v182 = vld [vmem:[#allocation5 + $0x2c] sm:$0xf]
    %v183 = vld [vmem:[#allocation5 + $0x30] sm:$0xf]
    %v184 = vld [vmem:[#allocation5 + $0x34] sm:$0xf]
    %v185 = vld [vmem:[#allocation5 + $0x38] sm:$0xf]
    %v186 = vld [vmem:[#allocation5 + $0x3c] sm:$0xf]
    %v187 = vld [vmem:[#allocation5 + $0x40] sm:$0xf]
    %v188 = vld [vmem:[#allocation5 + $0x44] sm:$0xf]
    %v189 = vld [vmem:[#allocation5 + $0x48] sm:$0xf]
    %v190 = vld [vmem:[#allocation5 + $0x4c] sm:$0xf]
    %v191 = vld [vmem:[#allocation5 + $0x50] sm:$0xf]
    %v192 = vld [vmem:[#allocation5 + $0x54] sm:$0xf]
    %v193 = vld [vmem:[#allocation5 + $0x58] sm:$0xf]
    %v194 = vld [vmem:[#allocation5 + $0x5c] sm:$0xf]
    %v195 = vld [vmem:[#allocation5 + $0x60] sm:$0xf]
    %v196 = vld [vmem:[#allocation5 + $0x64] sm:$0xf]
    %v197 = vld [vmem:[#allocation5 + $0x68] sm:$0xf]
    %v198 = vld [vmem:[#allocation5 + $0x6c] sm:$0xf]
    %v199 = vld [vmem:[#allocation5 + $0x70] sm:$0xf]
    %v200 = vld [vmem:[#allocation5 + $0x74] sm:$0xf]
    %v201 = vld [vmem:[#allocation5 + $0x78] sm:$0xf]
    %v202 = vld [vmem:[#allocation5 + $0x7c] sm:$0xf]
    %v203 = vld [vmem:[%s6] sm:$0x1]
    %v205 = vperm.slane %v203, 0
    %v239 = vunpack.c.l.b16 %v171
    %v240 = vunpack.c.l.b16 %v172
    %v241 = vunpack.c.l.b16 %v173
    %v242 = vunpack.c.l.b16 %v174
    %v243 = vunpack.c.l.b16 %v175
    %v244 = vunpack.c.l.b16 %v176
    %v245 = vunpack.c.l.b16 %v177
    %v246 = vunpack.c.l.b16 %v178
    %v247 = vunpack.c.l.b16 %v179
    %v248 = vunpack.c.l.b16 %v180
    %v249 = vunpack.c.l.b16 %v181
    %v250 = vunpack.c.l.b16 %v182
    %v251 = vunpack.c.l.b16 %v183
    %v252 = vunpack.c.l.b16 %v184
    %v253 = vunpack.c.l.b16 %v185
    %v254 = vunpack.c.l.b16 %v186
    %v255 = vunpack.c.l.b16 %v187
    %v256 = vunpack.c.l.b16 %v188
    %v257 = vunpack.c.l.b16 %v189
    %v258 = vunpack.c.l.b16 %v190
    %v259 = vunpack.c.l.b16 %v191
    %v260 = vunpack.c.l.b16 %v192
    %v261 = vunpack.c.l.b16 %v193
    %v262 = vunpack.c.l.b16 %v194
    %v263 = vunpack.c.l.b16 %v195
    %v264 = vunpack.c.l.b16 %v196
    %v265 = vunpack.c.l.b16 %v197
    %v266 = vunpack.c.l.b16 %v198
    %v267 = vunpack.c.l.b16 %v199
    %v268 = vunpack.c.l.b16 %v200
    %v269 = vunpack.c.l.b16 %v201
    %v270 = vunpack.c.l.b16 %v202
    %v271 = vpack.c.b16 %v240, %v239
    %v272 = vpack.c.b16 %v242, %v241
    %v273 = vpack.c.b16 %v244, %v243
    %v274 = vpack.c.b16 %v246, %v245
    %v275 = vpack.c.b16 %v248, %v247
    %v276 = vpack.c.b16 %v250, %v249
    %v277 = vpack.c.b16 %v252, %v251
    %v278 = vpack.c.b16 %v254, %v253
    %v279 = vpack.c.b16 %v256, %v255
    %v280 = vpack.c.b16 %v258, %v257
    %v281 = vpack.c.b16 %v260, %v259
    %v282 = vpack.c.b16 %v262, %v261
    %v283 = vpack.c.b16 %v264, %v263
    %v284 = vpack.c.b16 %v266, %v265
    %v285 = vpack.c.b16 %v268, %v267
    %v286 = vpack.c.b16 %v270, %v269
    %303 = vmatpush.bf16.msra.mxu0 %v278
    %304 = vmatpush.bf16.msra.mxu0 %v277
    %305 = vmatpush.bf16.msra.mxu0 %v276
    %306 = vmatpush.bf16.msra.mxu0 %v275
    %307 = vmatpush.bf16.msra.mxu0 %v274
    %308 = vmatpush.bf16.msra.mxu0 %v273
    %309 = vmatpush.bf16.msra.mxu0 %v272
    %310 = vmatpush.bf16.msra.mxu0 %v271
    %311 = vmatmul.bf16.gmra.mxu0 %v169
    %v312 = vpop.f32.mrf.mxu0
    %v313 = vadd.f32 %v205, %v312
    %v314 = vpop.f32.mrf.mxu0
    %315 = vdwg.mxu0
    %316 = vmatpush.bf16.msra.mxu0 %v286
    %317 = vmatpush.bf16.msra.mxu0 %v285
    %318 = vmatpush.bf16.msra.mxu0 %v284
    %319 = vmatpush.bf16.msra.mxu0 %v283
    %320 = vmatpush.bf16.msra.mxu0 %v282
    %321 = vmatpush.bf16.msra.mxu0 %v281
    %322 = vmatpush.bf16.msra.mxu0 %v280
    %323 = vmatpush.bf16.msra.mxu0 %v279
    %324 = vmatmul.bf16.gmra.mxu0 %v170
    %v325 = vpop.f32.mrf.mxu0
    %v326 = vadd.f32 %v313, %v325
    %v327 = vpop.f32.mrf.mxu0
    %328 = vdwg.mxu0
    %329 = vst [vmem:[#allocation7] sm:$0xff] %v326
    // Predicated region
    $region38: #{tpu_custom_call.1} parent=1 // pred_check
      _
    $region39: #{tpu_custom_call.1} parent=1 // pred_check_branch
      %331 = sbr.rel (0) target = $region41
    $region40: #{tpu_custom_call.1} parent=1 // pred_region
      %333 = vsyncadd [#allocation4], 0
      %s335 = sshll.u32 [#allocation7], 4
      %s336 = int_to_ptr.vmem [resolvable:$true] %s335
      %s337 = sshll.u32 %s7, 4
      %s338 = int_to_ptr.hbm [resolvable:$true] %s337
      %340 = dma.vmem_to_hbm [thread:$0]  %s336, 128, %s338, [#allocation4]
    $region41: #{tpu_custom_call.1} parent=1 // pred_fallthru
      _
    // Predicated region
    $region42: #{tpu_custom_call.1} parent=1 // pred_check
      _
    $region43: #{tpu_custom_call.1} parent=1 // pred_check_branch
      %342 = sbr.rel (0) target = $region45
    $region44: #{tpu_custom_call.1} parent=1 // pred_region
      %344 = dma.done [#allocation4], 128
    $region45: #{tpu_custom_call.1} parent=1 // pred_fallthru
      _
    %345 = vsyncpa [#allocation3], 1
    %346 = vsyncpa [#allocation6], 1
    %347 = vsyncpa [#allocation4], 1

</llo_original>
